<compile_context>
chip_gen: v7x
topology: tpu7x:2x2x1
jax: 0.10.0
libtpu: 0.0.40
codegen_flags: <defaults>
</compile_context>

<pallas_src>
import jax
import jax.numpy as jnp
from jax.experimental import pallas as pl
from jax.experimental.pallas import tpu as pltpu


def _round_up(a, b):
    return ((a + b - 1) // b) * b


def _make_mlp1x1_kernel(layer_dims, pix_tile):
    """Kernel over one (1, C_in, pix_tile) slab: fused chain of 1x1 convs on the VPU.

    layer_dims: list of (cin_l, cout_l).  Params arrive as transposed weights
    (cout_l, cin_l) and biases (cout_l, 1), all kept resident in VMEM.
    """
    num_layers = len(layer_dims)

    def kernel(*refs):
        x_ref = refs[0]
        out_ref = refs[-1]
        param_refs = refs[1:-1]  # w0_t, b0, w1_t, b1, ...

        h = x_ref[0].astype(jnp.float32)  # (C_in, pix_tile), lane-dense
        for l, (cin_l, cout_l) in enumerate(layer_dims):
            wt = param_refs[2 * l][...].astype(jnp.float32)       # (cout_l, cin_l)
            b = param_refs[2 * l + 1][...].astype(jnp.float32)    # (cout_l, 1)
            # acc[co, p] = b[co] + sum_ci w[ci, co] * h[ci, p]
            # Unrolled rank-1 updates: (cout_l, 1) * (1, pix) broadcasts keep
            # the full (cout_l, pix) tile packed in vregs -- pure VPU, no MXU.
            acc = jnp.broadcast_to(b, (cout_l, pix_tile))
            for ci in range(cin_l):
                acc = acc + wt[:, ci:ci + 1] * h[ci:ci + 1, :]
            if l < num_layers - 1:  # ReLU on all but the last conv
                acc = jnp.maximum(acc, 0.0)
            h = acc
        out_ref[0] = h.astype(out_ref.dtype)

    return kernel


def conv_2d_forward(x_nchw, weights, biases, *, max_pix_tile=8192):
    """x_nchw: (N, C_in, H, W). weights[l]: (Cin_l, Cout_l). biases[l]: (Cout_l,)."""
    n, c_in, h, w = x_nchw.shape
    num_layers = len(weights)
    layer_dims = [tuple(wl.shape) for wl in weights]      # [(cin_l, cout_l), ...]
    c_out = layer_dims[-1][1]

    hw = h * w
    # Lane-dense pixel tile: whole H*W if it fits comfortably, else fixed chunks.
    if hw <= max_pix_tile:
        pix_tile = _round_up(hw, 128)
    else:
        pix_tile = max_pix_tile                            # multiple of 128
    hw_pad = _round_up(hw, pix_tile)

    # Pure reshape (no transpose): channels land on sublanes, pixels on lanes.
    x3 = x_nchw.reshape(n, c_in, hw)
    if hw_pad != hw:
        x3 = jnp.pad(x3, ((0, 0), (0, 0), (0, hw_pad - hw)))

    grid = (n, hw_pad // pix_tile)                         # >= 2 parallel steps (batch)

    in_specs = [pl.BlockSpec((1, c_in, pix_tile), lambda i, p: (i, 0, p))]
    kernel_args = [x3]
    for wl, bl in zip(weights, biases):
        cin_l, cout_l = wl.shape
        # Resident tiny params (constant index_map -> fetched once, never refetched).
        in_specs.append(pl.BlockSpec((cout_l, cin_l), lambda i, p: (0, 0)))
        in_specs.append(pl.BlockSpec((cout_l, 1), lambda i, p: (0, 0)))
        kernel_args.append(wl.T)                           # (cout_l, cin_l)
        kernel_args.append(bl.reshape(cout_l, 1))

    out_spec = pl.BlockSpec((1, c_out, pix_tile), lambda i, p: (i, 0, p))

    y3 = pl.pallas_call(
        _make_mlp1x1_kernel(layer_dims, pix_tile),
        out_shape=jax.ShapeDtypeStruct((n, c_out, hw_pad), x_nchw.dtype),
        grid=grid,
        in_specs=in_specs,
        out_specs=out_spec,
        compiler_params=pltpu.CompilerParams(
            dimension_semantics=("parallel", "parallel")),
    )(*kernel_args)

    if hw_pad != hw:
        y3 = y3[:, :, :hw]
    # Pure reshape back to NCHW (no transpose needed in this layout).
    return y3.reshape(n, c_out, h, w)


def init_params(key, features):
    """Deterministic init mimicking nn.Conv2d default (uniform +-1/sqrt(fan_in))."""
    weights, biases = [], []
    for l in range(len(features) - 1):
        cin, cout = features[l], features[l + 1]
        key, kw, kb = jax.random.split(key, 3)
        bound = 1.0 / jnp.sqrt(jnp.float32(cin))  # kernel is 1x1 so fan_in = cin
        w = jax.random.uniform(kw, (cin, cout), jnp.float32, -bound, bound)
        b = jax.random.uniform(kb, (cout,), jnp.float32, -bound, bound)
        weights.append(w)
        biases.append(b)
    return weights, biases


def reference_forward(x_nchw, weights, biases):
    """Plain-JAX reference for sanity checking (channel-first, no transposes)."""
    n, c, h, w = x_nchw.shape
    z = x_nchw.reshape(n, c, h * w)
    num_layers = len(weights)
    for l in range(num_layers):
        wl, bl = weights[l], biases[l]
        z = jnp.einsum('io,nip->nop', wl, z) + bl[None, :, None]
        if l < num_layers - 1:
            z = jnp.maximum(z, 0.0)
    c_out = weights[-1].shape[1]
    return z.reshape(n, c_out, h, w)


# TODO(synk): BatchNorm2d / InstanceNorm2d / last_func branches of conv_2d are
# not exercised by the implemented config (bn=False, In=False, last_func=None).

if __name__ == "__main__":
    features = [4, 8, 8, 6]   # conv 4->8 +ReLU, 8->8 +ReLU, 8->6
    key = jax.random.PRNGKey(0)
    key, kx = jax.random.split(key)

    x = jax.random.normal(kx, (2, 4, 16, 16), jnp.float32)  # NCHW, like PyTorch
    weights, biases = init_params(key, features)

    y = conv_2d_forward(x, weights, biases)
    y = jax.block_until_ready(y)

    y_ref = reference_forward(x, weights, biases)
    assert y.shape == (2, 6, 16, 16), y.shape
    assert jnp.allclose(y, y_ref, atol=1e-5, rtol=1e-5), "mismatch vs reference"

    print("KERNEL_OK")
</pallas_src>

<mosaic_0001>
module attributes {stable_mosaic.version = 11 : i64} {
  func.func @kernel(%arg0: i32, %arg1: i32, %arg2: memref<1x4x256xf32, #tpu.memory_space<vmem>>, %arg3: memref<8x4xf32, #tpu.memory_space<vmem>>, %arg4: memref<8x1xf32, #tpu.memory_space<vmem>>, %arg5: memref<8x8xf32, #tpu.memory_space<vmem>>, %arg6: memref<8x1xf32, #tpu.memory_space<vmem>>, %arg7: memref<6x8xf32, #tpu.memory_space<vmem>>, %arg8: memref<6x1xf32, #tpu.memory_space<vmem>>, %arg9: memref<1x6x256xf32, #tpu.memory_space<vmem>>) attributes {dimension_semantics = [#tpu.dimension_semantics<parallel>, #tpu.dimension_semantics<parallel>], iteration_bounds = array<i64: 2, 1>, scalar_prefetch = 0 : i64, scratch_operands = 0 : i64, tpu.core_type = #tpu.core_type<tc>, window_params = [{transform_indices = @transform_0, window_bounds = array<i64: 1, 4, 256>}, {pipeline_mode = #tpu.pipeline_mode<synchronous>, transform_indices = @transform_1, window_bounds = array<i64: 8, 4>}, {pipeline_mode = #tpu.pipeline_mode<synchronous>, transform_indices = @transform_2, window_bounds = array<i64: 8, 1>}, {pipeline_mode = #tpu.pipeline_mode<synchronous>, transform_indices = @transform_3, window_bounds = array<i64: 8, 8>}, {pipeline_mode = #tpu.pipeline_mode<synchronous>, transform_indices = @transform_4, window_bounds = array<i64: 8, 1>}, {pipeline_mode = #tpu.pipeline_mode<synchronous>, transform_indices = @transform_5, window_bounds = array<i64: 6, 8>}, {pipeline_mode = #tpu.pipeline_mode<synchronous>, transform_indices = @transform_6, window_bounds = array<i64: 6, 1>}, {transform_indices = @transform_7, window_bounds = array<i64: 1, 6, 256>}]} {
    %c0 = arith.constant 0 : index
    %c0_0 = arith.constant 0 : index
    %c0_1 = arith.constant 0 : index
    %0 = vector.load %arg2[%c0, %c0_0, %c0_1] : memref<1x4x256xf32, #tpu.memory_space<vmem>>, vector<1x4x256xf32>
    %1 = vector.shape_cast %0 : vector<1x4x256xf32> to vector<4x256xf32>
    %c0_2 = arith.constant 0 : index
    %c0_3 = arith.constant 0 : index
    %2 = vector.load %arg3[%c0_2, %c0_3] : memref<8x4xf32, #tpu.memory_space<vmem>>, vector<8x4xf32>
    %c0_4 = arith.constant 0 : index
    %c0_5 = arith.constant 0 : index
    %3 = vector.load %arg4[%c0_4, %c0_5] : memref<8x1xf32, #tpu.memory_space<vmem>>, vector<8x1xf32>
    %4 = vector.shape_cast %3 : vector<8x1xf32> to vector<8x1xf32>
    %5 = vector.broadcast %4 : vector<8x1xf32> to vector<8x256xf32>
    %6 = vector.extract_strided_slice %2 {offsets = [0, 0], sizes = [8, 1], strides = [1, 1]} : vector<8x4xf32> to vector<8x1xf32>
    %7 = vector.extract_strided_slice %1 {offsets = [0, 0], sizes = [1, 256], strides = [1, 1]} : vector<4x256xf32> to vector<1x256xf32>
    %8 = vector.broadcast %6 : vector<8x1xf32> to vector<8x256xf32>
    %9 = vector.broadcast %7 : vector<1x256xf32> to vector<8x256xf32>
    %10 = arith.mulf %8, %9 : vector<8x256xf32>
    %11 = arith.addf %5, %10 : vector<8x256xf32>
    %12 = vector.extract_strided_slice %2 {offsets = [0, 1], sizes = [8, 1], strides = [1, 1]} : vector<8x4xf32> to vector<8x1xf32>
    %13 = vector.extract_strided_slice %1 {offsets = [1, 0], sizes = [1, 256], strides = [1, 1]} : vector<4x256xf32> to vector<1x256xf32>
    %14 = vector.broadcast %12 : vector<8x1xf32> to vector<8x256xf32>
    %15 = vector.broadcast %13 : vector<1x256xf32> to vector<8x256xf32>
    %16 = arith.mulf %14, %15 : vector<8x256xf32>
    %17 = arith.addf %11, %16 : vector<8x256xf32>
    %18 = vector.extract_strided_slice %2 {offsets = [0, 2], sizes = [8, 1], strides = [1, 1]} : vector<8x4xf32> to vector<8x1xf32>
    %19 = vector.extract_strided_slice %1 {offsets = [2, 0], sizes = [1, 256], strides = [1, 1]} : vector<4x256xf32> to vector<1x256xf32>
    %20 = vector.broadcast %18 : vector<8x1xf32> to vector<8x256xf32>
    %21 = vector.broadcast %19 : vector<1x256xf32> to vector<8x256xf32>
    %22 = arith.mulf %20, %21 : vector<8x256xf32>
    %23 = arith.addf %17, %22 : vector<8x256xf32>
    %24 = vector.extract_strided_slice %2 {offsets = [0, 3], sizes = [8, 1], strides = [1, 1]} : vector<8x4xf32> to vector<8x1xf32>
    %25 = vector.extract_strided_slice %1 {offsets = [3, 0], sizes = [1, 256], strides = [1, 1]} : vector<4x256xf32> to vector<1x256xf32>
    %26 = vector.broadcast %24 : vector<8x1xf32> to vector<8x256xf32>
    %27 = vector.broadcast %25 : vector<1x256xf32> to vector<8x256xf32>
    %28 = arith.mulf %26, %27 : vector<8x256xf32>
    %29 = arith.addf %23, %28 : vector<8x256xf32>
    %cst = arith.constant 0.000000e+00 : f32
    %30 = vector.broadcast %cst : f32 to vector<8x256xf32>
    %31 = arith.maximumf %29, %30 : vector<8x256xf32>
    %c0_6 = arith.constant 0 : index
    %c0_7 = arith.constant 0 : index
    %32 = vector.load %arg5[%c0_6, %c0_7] : memref<8x8xf32, #tpu.memory_space<vmem>>, vector<8x8xf32>
    %c0_8 = arith.constant 0 : index
    %c0_9 = arith.constant 0 : index
    %33 = vector.load %arg6[%c0_8, %c0_9] : memref<8x1xf32, #tpu.memory_space<vmem>>, vector<8x1xf32>
    %34 = vector.shape_cast %33 : vector<8x1xf32> to vector<8x1xf32>
    %35 = vector.broadcast %34 : vector<8x1xf32> to vector<8x256xf32>
    %36 = vector.extract_strided_slice %32 {offsets = [0, 0], sizes = [8, 1], strides = [1, 1]} : vector<8x8xf32> to vector<8x1xf32>
    %37 = vector.extract_strided_slice %31 {offsets = [0, 0], sizes = [1, 256], strides = [1, 1]} : vector<8x256xf32> to vector<1x256xf32>
    %38 = vector.broadcast %36 : vector<8x1xf32> to vector<8x256xf32>
    %39 = vector.broadcast %37 : vector<1x256xf32> to vector<8x256xf32>
    %40 = arith.mulf %38, %39 : vector<8x256xf32>
    %41 = arith.addf %35, %40 : vector<8x256xf32>
    %42 = vector.extract_strided_slice %32 {offsets = [0, 1], sizes = [8, 1], strides = [1, 1]} : vector<8x8xf32> to vector<8x1xf32>
    %43 = vector.extract_strided_slice %31 {offsets = [1, 0], sizes = [1, 256], strides = [1, 1]} : vector<8x256xf32> to vector<1x256xf32>
    %44 = vector.broadcast %42 : vector<8x1xf32> to vector<8x256xf32>
    %45 = vector.broadcast %43 : vector<1x256xf32> to vector<8x256xf32>
    %46 = arith.mulf %44, %45 : vector<8x256xf32>
    %47 = arith.addf %41, %46 : vector<8x256xf32>
    %48 = vector.extract_strided_slice %32 {offsets = [0, 2], sizes = [8, 1], strides = [1, 1]} : vector<8x8xf32> to vector<8x1xf32>
    %49 = vector.extract_strided_slice %31 {offsets = [2, 0], sizes = [1, 256], strides = [1, 1]} : vector<8x256xf32> to vector<1x256xf32>
    %50 = vector.broadcast %48 : vector<8x1xf32> to vector<8x256xf32>
    %51 = vector.broadcast %49 : vector<1x256xf32> to vector<8x256xf32>
    %52 = arith.mulf %50, %51 : vector<8x256xf32>
    %53 = arith.addf %47, %52 : vector<8x256xf32>
    %54 = vector.extract_strided_slice %32 {offsets = [0, 3], sizes = [8, 1], strides = [1, 1]} : vector<8x8xf32> to vector<8x1xf32>
    %55 = vector.extract_strided_slice %31 {offsets = [3, 0], sizes = [1, 256], strides = [1, 1]} : vector<8x256xf32> to vector<1x256xf32>
    %56 = vector.broadcast %54 : vector<8x1xf32> to vector<8x256xf32>
    %57 = vector.broadcast %55 : vector<1x256xf32> to vector<8x256xf32>
    %58 = arith.mulf %56, %57 : vector<8x256xf32>
    %59 = arith.addf %53, %58 : vector<8x256xf32>
    %60 = vector.extract_strided_slice %32 {offsets = [0, 4], sizes = [8, 1], strides = [1, 1]} : vector<8x8xf32> to vector<8x1xf32>
    %61 = vector.extract_strided_slice %31 {offsets = [4, 0], sizes = [1, 256], strides = [1, 1]} : vector<8x256xf32> to vector<1x256xf32>
    %62 = vector.broadcast %60 : vector<8x1xf32> to vector<8x256xf32>
    %63 = vector.broadcast %61 : vector<1x256xf32> to vector<8x256xf32>
    %64 = arith.mulf %62, %63 : vector<8x256xf32>
    %65 = arith.addf %59, %64 : vector<8x256xf32>
    %66 = vector.extract_strided_slice %32 {offsets = [0, 5], sizes = [8, 1], strides = [1, 1]} : vector<8x8xf32> to vector<8x1xf32>
    %67 = vector.extract_strided_slice %31 {offsets = [5, 0], sizes = [1, 256], strides = [1, 1]} : vector<8x256xf32> to vector<1x256xf32>
    %68 = vector.broadcast %66 : vector<8x1xf32> to vector<8x256xf32>
    %69 = vector.broadcast %67 : vector<1x256xf32> to vector<8x256xf32>
    %70 = arith.mulf %68, %69 : vector<8x256xf32>
    %71 = arith.addf %65, %70 : vector<8x256xf32>
    %72 = vector.extract_strided_slice %32 {offsets = [0, 6], sizes = [8, 1], strides = [1, 1]} : vector<8x8xf32> to vector<8x1xf32>
    %73 = vector.extract_strided_slice %31 {offsets = [6, 0], sizes = [1, 256], strides = [1, 1]} : vector<8x256xf32> to vector<1x256xf32>
    %74 = vector.broadcast %72 : vector<8x1xf32> to vector<8x256xf32>
    %75 = vector.broadcast %73 : vector<1x256xf32> to vector<8x256xf32>
    %76 = arith.mulf %74, %75 : vector<8x256xf32>
    %77 = arith.addf %71, %76 : vector<8x256xf32>
    %78 = vector.extract_strided_slice %32 {offsets = [0, 7], sizes = [8, 1], strides = [1, 1]} : vector<8x8xf32> to vector<8x1xf32>
    %79 = vector.extract_strided_slice %31 {offsets = [7, 0], sizes = [1, 256], strides = [1, 1]} : vector<8x256xf32> to vector<1x256xf32>
    %80 = vector.broadcast %78 : vector<8x1xf32> to vector<8x256xf32>
    %81 = vector.broadcast %79 : vector<1x256xf32> to vector<8x256xf32>
    %82 = arith.mulf %80, %81 : vector<8x256xf32>
    %83 = arith.addf %77, %82 : vector<8x256xf32>
    %cst_10 = arith.constant 0.000000e+00 : f32
    %84 = vector.broadcast %cst_10 : f32 to vector<8x256xf32>
    %85 = arith.maximumf %83, %84 : vector<8x256xf32>
    %c0_11 = arith.constant 0 : index
    %c0_12 = arith.constant 0 : index
    %86 = vector.load %arg7[%c0_11, %c0_12] : memref<6x8xf32, #tpu.memory_space<vmem>>, vector<6x8xf32>
    %c0_13 = arith.constant 0 : index
    %c0_14 = arith.constant 0 : index
    %87 = vector.load %arg8[%c0_13, %c0_14] : memref<6x1xf32, #tpu.memory_space<vmem>>, vector<6x1xf32>
    %88 = vector.shape_cast %87 : vector<6x1xf32> to vector<6x1xf32>
    %89 = vector.broadcast %88 : vector<6x1xf32> to vector<6x256xf32>
    %90 = vector.extract_strided_slice %86 {offsets = [0, 0], sizes = [6, 1], strides = [1, 1]} : vector<6x8xf32> to vector<6x1xf32>
    %91 = vector.extract_strided_slice %85 {offsets = [0, 0], sizes = [1, 256], strides = [1, 1]} : vector<8x256xf32> to vector<1x256xf32>
    %92 = vector.broadcast %90 : vector<6x1xf32> to vector<6x256xf32>
    %93 = vector.broadcast %91 : vector<1x256xf32> to vector<6x256xf32>
    %94 = arith.mulf %92, %93 : vector<6x256xf32>
    %95 = arith.addf %89, %94 : vector<6x256xf32>
    %96 = vector.extract_strided_slice %86 {offsets = [0, 1], sizes = [6, 1], strides = [1, 1]} : vector<6x8xf32> to vector<6x1xf32>
    %97 = vector.extract_strided_slice %85 {offsets = [1, 0], sizes = [1, 256], strides = [1, 1]} : vector<8x256xf32> to vector<1x256xf32>
    %98 = vector.broadcast %96 : vector<6x1xf32> to vector<6x256xf32>
    %99 = vector.broadcast %97 : vector<1x256xf32> to vector<6x256xf32>
    %100 = arith.mulf %98, %99 : vector<6x256xf32>
    %101 = arith.addf %95, %100 : vector<6x256xf32>
    %102 = vector.extract_strided_slice %86 {offsets = [0, 2], sizes = [6, 1], strides = [1, 1]} : vector<6x8xf32> to vector<6x1xf32>
    %103 = vector.extract_strided_slice %85 {offsets = [2, 0], sizes = [1, 256], strides = [1, 1]} : vector<8x256xf32> to vector<1x256xf32>
    %104 = vector.broadcast %102 : vector<6x1xf32> to vector<6x256xf32>
    %105 = vector.broadcast %103 : vector<1x256xf32> to vector<6x256xf32>
    %106 = arith.mulf %104, %105 : vector<6x256xf32>
    %107 = arith.addf %101, %106 : vector<6x256xf32>
    %108 = vector.extract_strided_slice %86 {offsets = [0, 3], sizes = [6, 1], strides = [1, 1]} : vector<6x8xf32> to vector<6x1xf32>
    %109 = vector.extract_strided_slice %85 {offsets = [3, 0], sizes = [1, 256], strides = [1, 1]} : vector<8x256xf32> to vector<1x256xf32>
    %110 = vector.broadcast %108 : vector<6x1xf32> to vector<6x256xf32>
    %111 = vector.broadcast %109 : vector<1x256xf32> to vector<6x256xf32>
    %112 = arith.mulf %110, %111 : vector<6x256xf32>
    %113 = arith.addf %107, %112 : vector<6x256xf32>
    %114 = vector.extract_strided_slice %86 {offsets = [0, 4], sizes = [6, 1], strides = [1, 1]} : vector<6x8xf32> to vector<6x1xf32>
    %115 = vector.extract_strided_slice %85 {offsets = [4, 0], sizes = [1, 256], strides = [1, 1]} : vector<8x256xf32> to vector<1x256xf32>
    %116 = vector.broadcast %114 : vector<6x1xf32> to vector<6x256xf32>
    %117 = vector.broadcast %115 : vector<1x256xf32> to vector<6x256xf32>
    %118 = arith.mulf %116, %117 : vector<6x256xf32>
    %119 = arith.addf %113, %118 : vector<6x256xf32>
    %120 = vector.extract_strided_slice %86 {offsets = [0, 5], sizes = [6, 1], strides = [1, 1]} : vector<6x8xf32> to vector<6x1xf32>
    %121 = vector.extract_strided_slice %85 {offsets = [5, 0], sizes = [1, 256], strides = [1, 1]} : vector<8x256xf32> to vector<1x256xf32>
    %122 = vector.broadcast %120 : vector<6x1xf32> to vector<6x256xf32>
    %123 = vector.broadcast %121 : vector<1x256xf32> to vector<6x256xf32>
    %124 = arith.mulf %122, %123 : vector<6x256xf32>
    %125 = arith.addf %119, %124 : vector<6x256xf32>
    %126 = vector.extract_strided_slice %86 {offsets = [0, 6], sizes = [6, 1], strides = [1, 1]} : vector<6x8xf32> to vector<6x1xf32>
    %127 = vector.extract_strided_slice %85 {offsets = [6, 0], sizes = [1, 256], strides = [1, 1]} : vector<8x256xf32> to vector<1x256xf32>
    %128 = vector.broadcast %126 : vector<6x1xf32> to vector<6x256xf32>
    %129 = vector.broadcast %127 : vector<1x256xf32> to vector<6x256xf32>
    %130 = arith.mulf %128, %129 : vector<6x256xf32>
    %131 = arith.addf %125, %130 : vector<6x256xf32>
    %132 = vector.extract_strided_slice %86 {offsets = [0, 7], sizes = [6, 1], strides = [1, 1]} : vector<6x8xf32> to vector<6x1xf32>
    %133 = vector.extract_strided_slice %85 {offsets = [7, 0], sizes = [1, 256], strides = [1, 1]} : vector<8x256xf32> to vector<1x256xf32>
    %134 = vector.broadcast %132 : vector<6x1xf32> to vector<6x256xf32>
    %135 = vector.broadcast %133 : vector<1x256xf32> to vector<6x256xf32>
    %136 = arith.mulf %134, %135 : vector<6x256xf32>
    %137 = arith.addf %131, %136 : vector<6x256xf32>
    %c0_15 = arith.constant 0 : index
    %c0_16 = arith.constant 0 : index
    %c0_17 = arith.constant 0 : index
    %138 = vector.load %arg9[%c0_15, %c0_16, %c0_17] : memref<1x6x256xf32, #tpu.memory_space<vmem>>, vector<1x6x256xf32>
    %139 = vector.shape_cast %138 : vector<1x6x256xf32> to vector<6x256xf32>
    %140 = vector.shape_cast %137 : vector<6x256xf32> to vector<1x6x256xf32>
    tpu.vector_store %arg9[%c0_15, %c0_16, %c0_17], %140 {strides = array<i32>} : memref<1x6x256xf32, #tpu.memory_space<vmem>>, vector<1x6x256xf32>,
    return
  }
  func.func @transform_0(%arg0: i32, %arg1: i32) -> (i32, i32, i32) {
    %c0_i32 = arith.constant 0 : i32
    %c0_i32_0 = arith.constant 0 : i32
    return %arg0, %c0_i32, %arg1 : i32, i32, i32
  }
  func.func @transform_1(%arg0: i32, %arg1: i32) -> (i32, i32) {
    %c0_i32 = arith.constant 0 : i32
    %c0_i32_0 = arith.constant 0 : i32
    %c0_i32_1 = arith.constant 0 : i32
    return %c0_i32, %c0_i32_0 : i32, i32
  }
  func.func @transform_2(%arg0: i32, %arg1: i32) -> (i32, i32) {
    %c0_i32 = arith.constant 0 : i32
    %c0_i32_0 = arith.constant 0 : i32
    %c0_i32_1 = arith.constant 0 : i32
    return %c0_i32, %c0_i32_0 : i32, i32
  }
  func.func @transform_3(%arg0: i32, %arg1: i32) -> (i32, i32) {
    %c0_i32 = arith.constant 0 : i32
    %c0_i32_0 = arith.constant 0 : i32
    %c0_i32_1 = arith.constant 0 : i32
    return %c0_i32, %c0_i32_0 : i32, i32
  }
  func.func @transform_4(%arg0: i32, %arg1: i32) -> (i32, i32) {
    %c0_i32 = arith.constant 0 : i32
    %c0_i32_0 = arith.constant 0 : i32
    %c0_i32_1 = arith.constant 0 : i32
    return %c0_i32, %c0_i32_0 : i32, i32
  }
  func.func @transform_5(%arg0: i32, %arg1: i32) -> (i32, i32) {
    %c0_i32 = arith.constant 0 : i32
    %c0_i32_0 = arith.constant 0 : i32
    %c0_i32_1 = arith.constant 0 : i32
    return %c0_i32, %c0_i32_0 : i32, i32
  }
  func.func @transform_6(%arg0: i32, %arg1: i32) -> (i32, i32) {
    %c0_i32 = arith.constant 0 : i32
    %c0_i32_0 = arith.constant 0 : i32
    %c0_i32_1 = arith.constant 0 : i32
    return %c0_i32, %c0_i32_0 : i32, i32
  }
  func.func @transform_7(%arg0: i32, %arg1: i32) -> (i32, i32, i32) {
    %c0_i32 = arith.constant 0 : i32
    %c0_i32_0 = arith.constant 0 : i32
    return %arg0, %c0_i32, %arg1 : i32, i32, i32
  }
}

</mosaic_0001>

<llo_original>
// kernel: tpu_custom_call.1
$region0: #{tpu_custom_call.1}
  #allocation0 [shape = 'u32[]', space=smem, size = 0x4, offset = 0x4, fixed_abs, tag = 'smem constant byte address 0x4 - core index']
  #allocation1 [shape = 'u32[144,128]{1,0:T(1,128)}', space=vmem, size = 0x12000, scoped, tag = 'internal scratch']
  %s0 = inlined_call_operand.vmem [shape: f32[2,4,256], index: 0, kind: input, shape index: {}]
  %s1 = inlined_call_operand.vmem [shape: f32[8,4], index: 1, kind: input, shape index: {}]
  %s2 = inlined_call_operand.vmem [shape: f32[8,1], index: 2, kind: input, shape index: {}]
  %s3 = inlined_call_operand.vmem [shape: f32[8,8], index: 3, kind: input, shape index: {}]
  %s4 = inlined_call_operand.vmem [shape: f32[8,1], index: 4, kind: input, shape index: {}]
  %s5 = inlined_call_operand.vmem [shape: f32[6,8], index: 5, kind: input, shape index: {}]
  %s6 = inlined_call_operand.vmem [shape: f32[6,1], index: 6, kind: input, shape index: {}]
  %s7 = inlined_call_operand.vmem [shape: f32[2,6,256], index: 7, kind: output, shape index: {}]
  %s8 = sld [smem:[#allocation0]]
  $region61: #{tpu_custom_call.1} parent=0
    _
  %s10 = ssub.s32 1, %s8
  %s11 = scalar_select 0, %s10, %s8
  loop: start=0, step=1, limit=4
  $region2: #{tpu_custom_call.1} parent=0 // loop_pre_header
    _
  $region3: #{tpu_custom_call.1} parent=0 // loop_header
    %s13 = sphi 0, %s17
    %p14 = scmp.ge.s32.totalorder %s13, 4
    %s20 = sphi 0, %s32
    %s21 = sphi 0, %s28
    %s22 = sphi 0, %s20
    %s23 = sphi 0, %s21
    %s24 = sphi 0, %s22
    %s25 = sphi 0, %s23
    %s37 = sphi 0, %s39
    %s40 = sphi 0, %s37
    %s41 = sphi 0, %s40
    %s57 = sphi 0, %s41
    %s61 = sphi 0, %s61
    %s63 = sphi 0, %s61
    %s64 = sphi 0, %s63
    %s78 = sphi 0, %s64
    %s82 = sphi 0, %s82
    %s84 = sphi 0, %s82
    %s85 = sphi 0, %s84
    %s99 = sphi 0, %s85
    %s103 = sphi 0, %s103
    %s105 = sphi 0, %s103
    %s106 = sphi 0, %s105
    %s120 = sphi 0, %s106
    %s124 = sphi 0, %s124
    %s126 = sphi 0, %s124
    %s127 = sphi 0, %s126
    %s141 = sphi 0, %s127
    %s145 = sphi 0, %s145
    %s147 = sphi 0, %s145
    %s148 = sphi 0, %s147
    %s162 = sphi 0, %s148
    %s166 = sphi 0, %s166
    %s168 = sphi 0, %s166
    %s169 = sphi 0, %s168
    %s183 = sphi 0, %s169
    %s191 = sphi 0, %s193
    %s194 = sphi 0, %s191
    %s195 = sphi 0, %s194
    %s211 = sphi 0, %s195
  $region4: #{tpu_custom_call.1} parent=0 // loop_header_branch
    %16 = sbr.rel (%p14) target = $region8
  $region5: #{tpu_custom_call.1} parent=0 // loop_body
    %s18 = ssub.s32 %s13, 1
    %s19 = ssub.s32 %s13, 2
    %s26 = sadd.s32 1, %s21
    %p27 = scmp.ge.s32.totalorder %s26, 1
    %s28 = scalar_select %p27, 0, %s26
    %s29 = sadd.s32 1, %s20
    %s30 = scalar_select %p27, %s29, %s20
    %p31 = scmp.ge.s32.totalorder %s30, 2
    %s32 = scalar_select %p31, 0, %s30
    %s33 = ssub.s32 %s20, %s32
    %s34 = ssub.s32 %s21, %s28
    %s35 = sor.u32 %s33, %s34
    %p36 = scmp.eq.s32.totalorder %s35, 0
    %s38 = sadd.s32 %s37, 1
    %s39 = scalar_select %p36, %s37, %s38
    %p42 = pneg %p36
    %p43 = scmp.eq.s32.totalorder %s13, 1
    %p44 = por %p42, %p43
    %p45 = scmp.ne.s32.totalorder %s37, %s40
    %p46 = scmp.eq.s32.totalorder %s13, 0
    %p47 = por %p45, %p46
    %p48 = scmp.ne.s32.totalorder %s37, %s40
    %p49 = scmp.eq.s32.totalorder %s18, 1
    %p50 = por %p48, %p49
    %p51 = scmp.ne.s32.totalorder %s40, %s41
    %p52 = scmp.eq.s32.totalorder %s18, 0
    %p53 = por %p51, %p52
    %p54 = scmp.ne.s32.totalorder %s40, %s41
    %p55 = scmp.eq.s32.totalorder %s19, 1
    %p56 = por %p54, %p55
    %p58 = scmp.ne.s32.totalorder %s41, %s57
    %p59 = scmp.eq.s32.totalorder %s19, 0
    %p60 = por %p58, %p59
    %s62 = sadd.s32 %s61, 1
    %p65 = scmp.eq.s32.totalorder %s13, 1
    %p66 = scmp.ne.s32.totalorder %s61, %s63
    %p67 = scmp.eq.s32.totalorder %s13, 0
    %p68 = por %p66, %p67
    %p69 = scmp.ne.s32.totalorder %s61, %s63
    %p70 = scmp.eq.s32.totalorder %s18, 1
    %p71 = por %p69, %p70
    %p72 = scmp.ne.s32.totalorder %s63, %s64
    %p73 = scmp.eq.s32.totalorder %s18, 0
    %p74 = por %p72, %p73
    %p75 = scmp.ne.s32.totalorder %s63, %s64
    %p76 = scmp.eq.s32.totalorder %s19, 1
    %p77 = por %p75, %p76
    %p79 = scmp.ne.s32.totalorder %s64, %s78
    %p80 = scmp.eq.s32.totalorder %s19, 0
    %p81 = por %p79, %p80
    %s83 = sadd.s32 %s82, 1
    %p86 = scmp.eq.s32.totalorder %s13, 1
    %p87 = scmp.ne.s32.totalorder %s82, %s84
    %p88 = scmp.eq.s32.totalorder %s13, 0
    %p89 = por %p87, %p88
    %p90 = scmp.ne.s32.totalorder %s82, %s84
    %p91 = scmp.eq.s32.totalorder %s18, 1
    %p92 = por %p90, %p91
    %p93 = scmp.ne.s32.totalorder %s84, %s85
    %p94 = scmp.eq.s32.totalorder %s18, 0
    %p95 = por %p93, %p94
    %p96 = scmp.ne.s32.totalorder %s84, %s85
    %p97 = scmp.eq.s32.totalorder %s19, 1
    %p98 = por %p96, %p97
    %p100 = scmp.ne.s32.totalorder %s85, %s99
    %p101 = scmp.eq.s32.totalorder %s19, 0
    %p102 = por %p100, %p101
    %s104 = sadd.s32 %s103, 1
    %p107 = scmp.eq.s32.totalorder %s13, 1
    %p108 = scmp.ne.s32.totalorder %s103, %s105
    %p109 = scmp.eq.s32.totalorder %s13, 0
    %p110 = por %p108, %p109
    %p111 = scmp.ne.s32.totalorder %s103, %s105
    %p112 = scmp.eq.s32.totalorder %s18, 1
    %p113 = por %p111, %p112
    %p114 = scmp.ne.s32.totalorder %s105, %s106
    %p115 = scmp.eq.s32.totalorder %s18, 0
    %p116 = por %p114, %p115
    %p117 = scmp.ne.s32.totalorder %s105, %s106
    %p118 = scmp.eq.s32.totalorder %s19, 1
    %p119 = por %p117, %p118
    %p121 = scmp.ne.s32.totalorder %s106, %s120
    %p122 = scmp.eq.s32.totalorder %s19, 0
    %p123 = por %p121, %p122
    %s125 = sadd.s32 %s124, 1
    %p128 = scmp.eq.s32.totalorder %s13, 1
    %p129 = scmp.ne.s32.totalorder %s124, %s126
    %p130 = scmp.eq.s32.totalorder %s13, 0
    %p131 = por %p129, %p130
    %p132 = scmp.ne.s32.totalorder %s124, %s126
    %p133 = scmp.eq.s32.totalorder %s18, 1
    %p134 = por %p132, %p133
    %p135 = scmp.ne.s32.totalorder %s126, %s127
    %p136 = scmp.eq.s32.totalorder %s18, 0
    %p137 = por %p135, %p136
    %p138 = scmp.ne.s32.totalorder %s126, %s127
    %p139 = scmp.eq.s32.totalorder %s19, 1
    %p140 = por %p138, %p139
    %p142 = scmp.ne.s32.totalorder %s127, %s141
    %p143 = scmp.eq.s32.totalorder %s19, 0
    %p144 = por %p142, %p143
    %s146 = sadd.s32 %s145, 1
    %p149 = scmp.eq.s32.totalorder %s13, 1
    %p150 = scmp.ne.s32.totalorder %s145, %s147
    %p151 = scmp.eq.s32.totalorder %s13, 0
    %p152 = por %p150, %p151
    %p153 = scmp.ne.s32.totalorder %s145, %s147
    %p154 = scmp.eq.s32.totalorder %s18, 1
    %p155 = por %p153, %p154
    %p156 = scmp.ne.s32.totalorder %s147, %s148
    %p157 = scmp.eq.s32.totalorder %s18, 0
    %p158 = por %p156, %p157
    %p159 = scmp.ne.s32.totalorder %s147, %s148
    %p160 = scmp.eq.s32.totalorder %s19, 1
    %p161 = por %p159, %p160
    %p163 = scmp.ne.s32.totalorder %s148, %s162
    %p164 = scmp.eq.s32.totalorder %s19, 0
    %p165 = por %p163, %p164
    %s167 = sadd.s32 %s166, 1
    %p170 = scmp.eq.s32.totalorder %s13, 1
    %p171 = scmp.ne.s32.totalorder %s166, %s168
    %p172 = scmp.eq.s32.totalorder %s13, 0
    %p173 = por %p171, %p172
    %p174 = scmp.ne.s32.totalorder %s166, %s168
    %p175 = scmp.eq.s32.totalorder %s18, 1
    %p176 = por %p174, %p175
    %p177 = scmp.ne.s32.totalorder %s168, %s169
    %p178 = scmp.eq.s32.totalorder %s18, 0
    %p179 = por %p177, %p178
    %p180 = scmp.ne.s32.totalorder %s168, %s169
    %p181 = scmp.eq.s32.totalorder %s19, 1
    %p182 = por %p180, %p181
    %p184 = scmp.ne.s32.totalorder %s169, %s183
    %p185 = scmp.eq.s32.totalorder %s19, 0
    %p186 = por %p184, %p185
    %s187 = ssub.s32 %s20, %s32
    %s188 = ssub.s32 %s21, %s28
    %s189 = sor.u32 %s187, %s188
    %p190 = scmp.eq.s32.totalorder %s189, 0
    %s192 = sadd.s32 %s191, 1
    %s193 = scalar_select %p190, %s191, %s192
    %p196 = pneg %p190
    %p197 = scmp.eq.s32.totalorder %s13, 1
    %p198 = por %p196, %p197
    %p199 = scmp.ne.s32.totalorder %s191, %s194
    %p200 = scmp.eq.s32.totalorder %s13, 0
    %p201 = por %p199, %p200
    %p202 = scmp.ne.s32.totalorder %s191, %s194
    %p203 = scmp.eq.s32.totalorder %s18, 1
    %p204 = por %p202, %p203
    %p205 = scmp.ne.s32.totalorder %s194, %s195
    %p206 = scmp.eq.s32.totalorder %s18, 0
    %p207 = por %p205, %p206
    %p208 = scmp.ne.s32.totalorder %s194, %s195
    %p209 = scmp.eq.s32.totalorder %s19, 1
    %p210 = por %p208, %p209
    %p212 = scmp.ne.s32.totalorder %s195, %s211
    %p213 = scmp.eq.s32.totalorder %s19, 0
    %p214 = por %p212, %p213
    %p215 = scmp.le.s32.totalorder 1, %s13
    %p216 = scmp.lt.s32.totalorder %s13, 3
    %p217 = pnand %p215, %p216
    %p218 = pneg %p217
    // Predicated region
    $region9: #{tpu_custom_call.1} parent=5 // pred_check
      _
    $region10: #{tpu_custom_call.1} parent=5 // pred_check_branch
      %220 = sbr.rel (%p217) target = $region12
    $region11: #{tpu_custom_call.1} parent=5 // pred_region
      %s221 = ssub.s32 %s13, 1
      // Predicated region
      $region13: #{tpu_custom_call.1} parent=11 // pred_check
        %p222 = pneg %p74
      $region14: #{tpu_custom_call.1} parent=11 // pred_check_branch
        %224 = sbr.rel (%p222) target = $region16
      $region15: #{tpu_custom_call.1} parent=11 // pred_region
        _
      $region16: #{tpu_custom_call.1} parent=11 // pred_fallthru
        _
      // Predicated region
      $region17: #{tpu_custom_call.1} parent=11 // pred_check
        %p225 = pneg %p95
      $region18: #{tpu_custom_call.1} parent=11 // pred_check_branch
        %227 = sbr.rel (%p225) target = $region20
      $region19: #{tpu_custom_call.1} parent=11 // pred_region
        _
      $region20: #{tpu_custom_call.1} parent=11 // pred_fallthru
        _
      // Predicated region
      $region21: #{tpu_custom_call.1} parent=11 // pred_check
        %p228 = pneg %p116
      $region22: #{tpu_custom_call.1} parent=11 // pred_check_branch
        %230 = sbr.rel (%p228) target = $region24
      $region23: #{tpu_custom_call.1} parent=11 // pred_region
        _
      $region24: #{tpu_custom_call.1} parent=11 // pred_fallthru
        _
      // Predicated region
      $region25: #{tpu_custom_call.1} parent=11 // pred_check
        %p231 = pneg %p137
      $region26: #{tpu_custom_call.1} parent=11 // pred_check_branch
        %233 = sbr.rel (%p231) target = $region28
      $region27: #{tpu_custom_call.1} parent=11 // pred_region
        _
      $region28: #{tpu_custom_call.1} parent=11 // pred_fallthru
        _
      // Predicated region
      $region29: #{tpu_custom_call.1} parent=11 // pred_check
        %p234 = pneg %p158
      $region30: #{tpu_custom_call.1} parent=11 // pred_check_branch
        %236 = sbr.rel (%p234) target = $region32
      $region31: #{tpu_custom_call.1} parent=11 // pred_region
        _
      $region32: #{tpu_custom_call.1} parent=11 // pred_fallthru
        _
      // Predicated region
      $region33: #{tpu_custom_call.1} parent=11 // pred_check
        %p237 = pneg %p179
      $region34: #{tpu_custom_call.1} parent=11 // pred_check_branch
        %239 = sbr.rel (%p237) target = $region36
      $region35: #{tpu_custom_call.1} parent=11 // pred_region
        _
      $region36: #{tpu_custom_call.1} parent=11 // pred_fallthru
        _
    $region12: #{tpu_custom_call.1} parent=5 // pred_fallthru
      _
    %p240 = scmp.lt.s32.totalorder %s13, 2
    // Predicated region
    $region37: #{tpu_custom_call.1} parent=5 // pred_check
      %p241 = pneg %p240
    $region38: #{tpu_custom_call.1} parent=5 // pred_check_branch
      %243 = sbr.rel (%p241) target = $region40
    $region39: #{tpu_custom_call.1} parent=5 // pred_region
      // Predicated region
      $region41: #{tpu_custom_call.1} parent=39 // pred_check
        %p244 = pneg %p47
      $region42: #{tpu_custom_call.1} parent=39 // pred_check_branch
        %246 = sbr.rel (%p244) target = $region44
      $region43: #{tpu_custom_call.1} parent=39 // pred_region
        %s247 = smul.u32 2, %s21
        %p248 = scmp.lt.s32.totalorder %s20, 1
        %s249 = scalar_select %p248, %s20, 1
        %p250 = scmp.lt.s32.totalorder %s247, 1
        %s251 = scalar_select %p250, %s247, 1
        %s252 = smul.addr %s249, 2
        %s253 = sadd.s32 %s251, %s252
        %s254 = smul.addr %s253, 4
        %s255 = scalar_lea.vmem %s0, %s254
        %s256 = smul.u32 2, %s21
      $region44: #{tpu_custom_call.1} parent=39 // pred_fallthru
        _
    $region40: #{tpu_custom_call.1} parent=5 // pred_fallthru
      _
    %p257 = scmp.le.s32.totalorder 1, %s13
    %p258 = scmp.lt.s32.totalorder %s13, 3
    %p259 = pnand %p257, %p258
    %p260 = pneg %p259
    // Predicated region
    $region45: #{tpu_custom_call.1} parent=5 // pred_check
      _
    $region46: #{tpu_custom_call.1} parent=5 // pred_check_branch
      %262 = sbr.rel (%p259) target = $region48
    $region47: #{tpu_custom_call.1} parent=5 // pred_region
      %s263 = ssub.s32 %s13, 1
      %s264 = smul.u32 2, %s23
      %p265 = scmp.lt.s32.totalorder %s22, 1
      %s266 = scalar_select %p265, %s22, 1
      %p267 = scmp.lt.s32.totalorder %s264, 1
      %s268 = scalar_select %p267, %s264, 1
      %s269 = smul.addr %s266, 2
      %s270 = sadd.s32 %s268, %s269
      %s271 = smul.addr %s270, 4
      %s272 = scalar_lea.vmem %s0, %s271
      %p273 = pneg %p53
      %p274 = pneg %p50
      %p275 = pneg %p74
      %p276 = pneg %p71
      %p277 = pneg %p95
      %p278 = pneg %p92
      %p279 = pneg %p116
      %p280 = pneg %p113
      %p281 = pneg %p137
      %p282 = pneg %p134
      %p283 = pneg %p158
      %p284 = pneg %p155
      %p285 = pneg %p179
      %p286 = pneg %p176
      %p287 = pneg %p207
      %p288 = pneg %p204
      %s289 = smul.u32 2, %s23
      %p290 = scmp.lt.s32.totalorder %s22, 1
      %s291 = scalar_select %p290, %s22, 1
      %p292 = scmp.lt.s32.totalorder %s289, 1
      %s293 = scalar_select %p292, %s289, 1
      %s294 = smul.addr %s291, 2
      %s295 = sadd.s32 %s293, %s294
      %s296 = smul.addr %s295, 8
      %s297 = scalar_lea.vmem %s7, %s296
      %s298 = smul.u32 2, %s23
      %p299 = scmp.lt.s32.totalorder %s22, 1
      %s300 = scalar_select %p299, %s22, 1
      %p301 = scmp.lt.s32.totalorder %s298, 1
      %s302 = scalar_select %p301, %s298, 1
      %s303 = smul.addr %s300, 2
      %s304 = sadd.s32 %s302, %s303
      %s305 = smul.addr %s304, 4
      %s306 = scalar_lea.vmem %s0, %s305
      %s307 = smul.u32 2, %s23
      %s308 = smul.u32 2, %s23
      %p309 = scmp.lt.s32.totalorder %s22, 1
      %s310 = scalar_select %p309, %s22, 1
      %p311 = scmp.lt.s32.totalorder %s308, 1
      %s312 = scalar_select %p311, %s308, 1
      %s313 = smul.addr %s310, 2
      %s314 = sadd.s32 %s312, %s313
      %s315 = smul.addr %s314, 8
      %s316 = scalar_lea.vmem %s7, %s315
      %s317 = smul.u32 2, %s23
      %v318 = vld [vmem:[%s306] sm:$0xff]
      %v319 = vld [vmem:[%s1] sm:$0xff]
      %v320 = vld [vmem:[%s2] sm:$0xff]
      %322 = vset.pattern.permute.xlu0 0
      %323 = vperm.xlu0 %322, %v320
      %v324 = vpop.permute.xlu0 %323
      %327 = vset.pattern.permute.xlu0 0
      %328 = vperm.xlu0 %327, %v319
      %v329 = vpop.permute.xlu0 %328
      %v332 = vlaneseq
      %v333 = vshrl.u32 %v332, 7
      %v334 = vsub.s32 0, %v333
      %v335 = vrot.slane %v318, %v334
      %v336 = vlaneseq
      %v337 = vshrl.u32 %v336, 7
      %v338 = vsub.s32 4, %v337
      %v339 = vrot.slane %v318, %v338
      %v342 = vlaneseq
      %v343 = vshrl.u32 %v342, 7
      %v344 = vsub.s32 0, %v343
      %v345 = vrot.slane %v335, %v344
      %v346 = vlaneseq
      %v347 = vshrl.u32 %v346, 7
      %v348 = vsub.s32 0, %v347
      %v349 = vrot.slane %v339, %v348
      %v350 = vmul.f32 %v329, %v345
      %v351 = vmul.f32 %v329, %v349
      %v352 = vadd.f32 %v324, %v350
      %v353 = vadd.f32 %v324, %v351
      %354 = vset.pattern.permute.xlu0 1
      %355 = vperm.xlu0 %354, %v319
      %v356 = vpop.permute.xlu0 %355
      %v358 = vlaneseq
      %v359 = vshrl.u32 %v358, 7
      %v360 = vsub.s32 1, %v359
      %v361 = vrot.slane %v318, %v360
      %v362 = vlaneseq
      %v363 = vshrl.u32 %v362, 7
      %v364 = vsub.s32 5, %v363
      %v365 = vrot.slane %v318, %v364
      %v368 = vlaneseq
      %v369 = vshrl.u32 %v368, 7
      %v370 = vsub.s32 1, %v369
      %v371 = vrot.slane %v361, %v370
      %v372 = vlaneseq
      %v373 = vshrl.u32 %v372, 7
      %v374 = vsub.s32 1, %v373
      %v375 = vrot.slane %v365, %v374
      %v376 = vmul.f32 %v356, %v371
      %v377 = vmul.f32 %v356, %v375
      %v378 = vadd.f32 %v352, %v376
      %v379 = vadd.f32 %v353, %v377
      %380 = vset.pattern.permute.xlu0 2
      %381 = vperm.xlu0 %380, %v319
      %v382 = vpop.permute.xlu0 %381
      %v384 = vlaneseq
      %v385 = vshrl.u32 %v384, 7
      %v386 = vsub.s32 2, %v385
      %v387 = vrot.slane %v318, %v386
      %v388 = vlaneseq
      %v389 = vshrl.u32 %v388, 7
      %v390 = vsub.s32 6, %v389
      %v391 = vrot.slane %v318, %v390
      %v394 = vlaneseq
      %v395 = vshrl.u32 %v394, 7
      %v396 = vsub.s32 2, %v395
      %v397 = vrot.slane %v387, %v396
      %v398 = vlaneseq
      %v399 = vshrl.u32 %v398, 7
      %v400 = vsub.s32 2, %v399
      %v401 = vrot.slane %v391, %v400
      %v402 = vmul.f32 %v382, %v397
      %v403 = vmul.f32 %v382, %v401
      %v404 = vadd.f32 %v378, %v402
      %v405 = vadd.f32 %v379, %v403
      %406 = vset.pattern.permute.xlu0 3
      %407 = vperm.xlu0 %406, %v319
      %v408 = vpop.permute.xlu0 %407
      %v410 = vlaneseq
      %v411 = vshrl.u32 %v410, 7
      %v412 = vsub.s32 3, %v411
      %v413 = vrot.slane %v318, %v412
      %v414 = vlaneseq
      %v415 = vshrl.u32 %v414, 7
      %v416 = vsub.s32 7, %v415
      %v417 = vrot.slane %v318, %v416
      %v420 = vlaneseq
      %v421 = vshrl.u32 %v420, 7
      %v422 = vsub.s32 3, %v421
      %v423 = vrot.slane %v413, %v422
      %v424 = vlaneseq
      %v425 = vshrl.u32 %v424, 7
      %v426 = vsub.s32 3, %v425
      %v427 = vrot.slane %v417, %v426
      %v428 = vmul.f32 %v408, %v423
      %v429 = vmul.f32 %v408, %v427
      %v430 = vadd.f32 %v404, %v428
      %v431 = vadd.f32 %v405, %v429
      %v432 = vmax.f32 %v430, 0.0
      %v433 = vmax.f32 %v431, 0.0
      %v434 = vld [vmem:[%s3] sm:$0xff]
      %v435 = vld [vmem:[%s4] sm:$0xff]
      %437 = vset.pattern.permute.xlu0 0
      %438 = vperm.xlu0 %437, %v435
      %v439 = vpop.permute.xlu0 %438
      %442 = vset.pattern.permute.xlu0 0
      %443 = vperm.xlu0 %442, %v434
      %v444 = vpop.permute.xlu0 %443
      %v446 = vlaneseq
      %v447 = vshrl.u32 %v446, 7
      %v448 = vsub.s32 0, %v447
      %v449 = vrot.slane %v432, %v448
      %v450 = vlaneseq
      %v451 = vshrl.u32 %v450, 7
      %v452 = vsub.s32 0, %v451
      %v453 = vrot.slane %v433, %v452
      %v454 = vmul.f32 %v444, %v449
      %v455 = vmul.f32 %v444, %v453
      %v456 = vadd.f32 %v439, %v454
      %v457 = vadd.f32 %v439, %v455
      %458 = vset.pattern.permute.xlu0 1
      %459 = vperm.xlu0 %458, %v434
      %v460 = vpop.permute.xlu0 %459
      %v462 = vlaneseq
      %v463 = vshrl.u32 %v462, 7
      %v464 = vsub.s32 1, %v463
      %v465 = vrot.slane %v432, %v464
      %v466 = vlaneseq
      %v467 = vshrl.u32 %v466, 7
      %v468 = vsub.s32 1, %v467
      %v469 = vrot.slane %v433, %v468
      %v470 = vmul.f32 %v460, %v465
      %v471 = vmul.f32 %v460, %v469
      %v472 = vadd.f32 %v456, %v470
      %v473 = vadd.f32 %v457, %v471
      %474 = vset.pattern.permute.xlu0 2
      %475 = vperm.xlu0 %474, %v434
      %v476 = vpop.permute.xlu0 %475
      %v478 = vlaneseq
      %v479 = vshrl.u32 %v478, 7
      %v480 = vsub.s32 2, %v479
      %v481 = vrot.slane %v432, %v480
      %v482 = vlaneseq
      %v483 = vshrl.u32 %v482, 7
      %v484 = vsub.s32 2, %v483
      %v485 = vrot.slane %v433, %v484
      %v486 = vmul.f32 %v476, %v481
      %v487 = vmul.f32 %v476, %v485
      %v488 = vadd.f32 %v472, %v486
      %v489 = vadd.f32 %v473, %v487
      %490 = vset.pattern.permute.xlu0 3
      %491 = vperm.xlu0 %490, %v434
      %v492 = vpop.permute.xlu0 %491
      %v494 = vlaneseq
      %v495 = vshrl.u32 %v494, 7
      %v496 = vsub.s32 3, %v495
      %v497 = vrot.slane %v432, %v496
      %v498 = vlaneseq
      %v499 = vshrl.u32 %v498, 7
      %v500 = vsub.s32 3, %v499
      %v501 = vrot.slane %v433, %v500
      %v502 = vmul.f32 %v492, %v497
      %v503 = vmul.f32 %v492, %v501
      %v504 = vadd.f32 %v488, %v502
      %v505 = vadd.f32 %v489, %v503
      %506 = vset.pattern.permute.xlu0 4
      %507 = vperm.xlu0 %506, %v434
      %v508 = vpop.permute.xlu0 %507
      %v510 = vlaneseq
      %v511 = vshrl.u32 %v510, 7
      %v512 = vsub.s32 4, %v511
      %v513 = vrot.slane %v432, %v512
      %v514 = vlaneseq
      %v515 = vshrl.u32 %v514, 7
      %v516 = vsub.s32 4, %v515
      %v517 = vrot.slane %v433, %v516
      %v518 = vmul.f32 %v508, %v513
      %v519 = vmul.f32 %v508, %v517
      %v520 = vadd.f32 %v504, %v518
      %v521 = vadd.f32 %v505, %v519
      %522 = vset.pattern.permute.xlu0 5
      %523 = vperm.xlu0 %522, %v434
      %v524 = vpop.permute.xlu0 %523
      %v526 = vlaneseq
      %v527 = vshrl.u32 %v526, 7
      %v528 = vsub.s32 5, %v527
      %v529 = vrot.slane %v432, %v528
      %v530 = vlaneseq
      %v531 = vshrl.u32 %v530, 7
      %v532 = vsub.s32 5, %v531
      %v533 = vrot.slane %v433, %v532
      %v534 = vmul.f32 %v524, %v529
      %v535 = vmul.f32 %v524, %v533
      %v536 = vadd.f32 %v520, %v534
      %v537 = vadd.f32 %v521, %v535
      %538 = vset.pattern.permute.xlu0 6
      %539 = vperm.xlu0 %538, %v434
      %v540 = vpop.permute.xlu0 %539
      %v542 = vlaneseq
      %v543 = vshrl.u32 %v542, 7
      %v544 = vsub.s32 6, %v543
      %v545 = vrot.slane %v432, %v544
      %v546 = vlaneseq
      %v547 = vshrl.u32 %v546, 7
      %v548 = vsub.s32 6, %v547
      %v549 = vrot.slane %v433, %v548
      %v550 = vmul.f32 %v540, %v545
      %v551 = vmul.f32 %v540, %v549
      %v552 = vadd.f32 %v536, %v550
      %v553 = vadd.f32 %v537, %v551
      %554 = vset.pattern.permute.xlu0 7
      %555 = vperm.xlu0 %554, %v434
      %v556 = vpop.permute.xlu0 %555
      %v558 = vlaneseq
      %v559 = vshrl.u32 %v558, 7
      %v560 = vsub.s32 7, %v559
      %v561 = vrot.slane %v432, %v560
      %v562 = vlaneseq
      %v563 = vshrl.u32 %v562, 7
      %v564 = vsub.s32 7, %v563
      %v565 = vrot.slane %v433, %v564
      %v566 = vmul.f32 %v556, %v561
      %v567 = vmul.f32 %v556, %v565
      %v568 = vadd.f32 %v552, %v566
      %v569 = vadd.f32 %v553, %v567
      %v570 = vmax.f32 %v568, 0.0
      %v571 = vmax.f32 %v569, 0.0
      %v572 = vld [vmem:[%s5] sm:$0x3f]
      %v573 = vld [vmem:[%s6] sm:$0x3f]
      %575 = vset.pattern.permute.xlu0 0
      %576 = vperm.xlu0 %575, %v573
      %v577 = vpop.permute.xlu0 %576
      %580 = vset.pattern.permute.xlu0 0
      %581 = vperm.xlu0 %580, %v572
      %v582 = vpop.permute.xlu0 %581
      %v584 = vlaneseq
      %v585 = vshrl.u32 %v584, 7
      %v586 = vsub.s32 0, %v585
      %v587 = vrot.slane %v570, %v586
      %v588 = vlaneseq
      %v589 = vshrl.u32 %v588, 7
      %v590 = vsub.s32 0, %v589
      %v591 = vrot.slane %v571, %v590
      %v592 = vmul.f32 %v582, %v587
      %v593 = vmul.f32 %v582, %v591
      %v594 = vadd.f32 %v577, %v592
      %v595 = vadd.f32 %v577, %v593
      %596 = vset.pattern.permute.xlu0 1
      %597 = vperm.xlu0 %596, %v572
      %v598 = vpop.permute.xlu0 %597
      %v600 = vlaneseq
      %v601 = vshrl.u32 %v600, 7
      %v602 = vsub.s32 1, %v601
      %v603 = vrot.slane %v570, %v602
      %v604 = vlaneseq
      %v605 = vshrl.u32 %v604, 7
      %v606 = vsub.s32 1, %v605
      %v607 = vrot.slane %v571, %v606
      %v608 = vmul.f32 %v598, %v603
      %v609 = vmul.f32 %v598, %v607
      %v610 = vadd.f32 %v594, %v608
      %v611 = vadd.f32 %v595, %v609
      %612 = vset.pattern.permute.xlu0 2
      %613 = vperm.xlu0 %612, %v572
      %v614 = vpop.permute.xlu0 %613
      %v616 = vlaneseq
      %v617 = vshrl.u32 %v616, 7
      %v618 = vsub.s32 2, %v617
      %v619 = vrot.slane %v570, %v618
      %v620 = vlaneseq
      %v621 = vshrl.u32 %v620, 7
      %v622 = vsub.s32 2, %v621
      %v623 = vrot.slane %v571, %v622
      %v624 = vmul.f32 %v614, %v619
      %v625 = vmul.f32 %v614, %v623
      %v626 = vadd.f32 %v610, %v624
      %v627 = vadd.f32 %v611, %v625
      %628 = vset.pattern.permute.xlu0 3
      %629 = vperm.xlu0 %628, %v572
      %v630 = vpop.permute.xlu0 %629
      %v632 = vlaneseq
      %v633 = vshrl.u32 %v632, 7
      %v634 = vsub.s32 3, %v633
      %v635 = vrot.slane %v570, %v634
      %v636 = vlaneseq
      %v637 = vshrl.u32 %v636, 7
      %v638 = vsub.s32 3, %v637
      %v639 = vrot.slane %v571, %v638
      %v640 = vmul.f32 %v630, %v635
      %v641 = vmul.f32 %v630, %v639
      %v642 = vadd.f32 %v626, %v640
      %v643 = vadd.f32 %v627, %v641
      %644 = vset.pattern.permute.xlu0 4
      %645 = vperm.xlu0 %644, %v572
      %v646 = vpop.permute.xlu0 %645
      %v648 = vlaneseq
      %v649 = vshrl.u32 %v648, 7
      %v650 = vsub.s32 4, %v649
      %v651 = vrot.slane %v570, %v650
      %v652 = vlaneseq
      %v653 = vshrl.u32 %v652, 7
      %v654 = vsub.s32 4, %v653
      %v655 = vrot.slane %v571, %v654
      %v656 = vmul.f32 %v646, %v651
      %v657 = vmul.f32 %v646, %v655
      %v658 = vadd.f32 %v642, %v656
      %v659 = vadd.f32 %v643, %v657
      %660 = vset.pattern.permute.xlu0 5
      %661 = vperm.xlu0 %660, %v572
      %v662 = vpop.permute.xlu0 %661
      %v664 = vlaneseq
      %v665 = vshrl.u32 %v664, 7
      %v666 = vsub.s32 5, %v665
      %v667 = vrot.slane %v570, %v666
      %v668 = vlaneseq
      %v669 = vshrl.u32 %v668, 7
      %v670 = vsub.s32 5, %v669
      %v671 = vrot.slane %v571, %v670
      %v672 = vmul.f32 %v662, %v667
      %v673 = vmul.f32 %v662, %v671
      %v674 = vadd.f32 %v658, %v672
      %v675 = vadd.f32 %v659, %v673
      %676 = vset.pattern.permute.xlu0 6
      %677 = vperm.xlu0 %676, %v572
      %v678 = vpop.permute.xlu0 %677
      %v680 = vlaneseq
      %v681 = vshrl.u32 %v680, 7
      %v682 = vsub.s32 6, %v681
      %v683 = vrot.slane %v570, %v682
      %v684 = vlaneseq
      %v685 = vshrl.u32 %v684, 7
      %v686 = vsub.s32 6, %v685
      %v687 = vrot.slane %v571, %v686
      %v688 = vmul.f32 %v678, %v683
      %v689 = vmul.f32 %v678, %v687
      %v690 = vadd.f32 %v674, %v688
      %v691 = vadd.f32 %v675, %v689
      %692 = vset.pattern.permute.xlu0 7
      %693 = vperm.xlu0 %692, %v572
      %v694 = vpop.permute.xlu0 %693
      %v696 = vlaneseq
      %v697 = vshrl.u32 %v696, 7
      %v698 = vsub.s32 7, %v697
      %v699 = vrot.slane %v570, %v698
      %v700 = vlaneseq
      %v701 = vshrl.u32 %v700, 7
      %v702 = vsub.s32 7, %v701
      %v703 = vrot.slane %v571, %v702
      %v704 = vmul.f32 %v694, %v699
      %v705 = vmul.f32 %v694, %v703
      %v706 = vadd.f32 %v690, %v704
      %v707 = vadd.f32 %v691, %v705
      %708 = vst [vmem:[%s316] sm:$0x3f] %v706
      %709 = vst [vmem:[%s316 + $0x8] sm:$0x3f] %v707
      %s710 = smul.u32 2, %s23
      %p711 = scmp.lt.s32.totalorder %s22, 1
      %s712 = scalar_select %p711, %s22, 1
      %p713 = scmp.lt.s32.totalorder %s710, 1
      %s714 = scalar_select %p713, %s710, 1
      %s715 = smul.addr %s712, 2
      %s716 = sadd.s32 %s714, %s715
      %s717 = smul.addr %s716, 8
      %s718 = scalar_lea.vmem %s7, %s717
      // Predicated region
      $region49: #{tpu_custom_call.1} parent=47 // pred_check
        %p719 = pneg %p204
      $region50: #{tpu_custom_call.1} parent=47 // pred_check_branch
        %721 = sbr.rel (%p719) target = $region52
      $region51: #{tpu_custom_call.1} parent=47 // pred_region
        %s722 = smul.u32 2, %s23
      $region52: #{tpu_custom_call.1} parent=47 // pred_fallthru
        _
    $region48: #{tpu_custom_call.1} parent=5 // pred_fallthru
      _
    %p723 = scmp.le.s32.totalorder 2, %s13
    // Predicated region
    $region53: #{tpu_custom_call.1} parent=5 // pred_check
      %p724 = pneg %p723
    $region54: #{tpu_custom_call.1} parent=5 // pred_check_branch
      %726 = sbr.rel (%p724) target = $region56
    $region55: #{tpu_custom_call.1} parent=5 // pred_region
      %s727 = ssub.s32 %s13, 2
      // Predicated region
      $region57: #{tpu_custom_call.1} parent=55 // pred_check
        %p728 = pneg %p210
      $region58: #{tpu_custom_call.1} parent=55 // pred_check_branch
        %730 = sbr.rel (%p728) target = $region60
      $region59: #{tpu_custom_call.1} parent=55 // pred_region
        %s731 = smul.u32 2, %s25
        %p732 = scmp.lt.s32.totalorder %s24, 1
        %s733 = scalar_select %p732, %s24, 1
        %p734 = scmp.lt.s32.totalorder %s731, 1
        %s735 = scalar_select %p734, %s731, 1
        %s736 = smul.addr %s733, 2
        %s737 = sadd.s32 %s735, %s736
        %s738 = smul.addr %s737, 8
        %s739 = scalar_lea.vmem %s7, %s738
      $region60: #{tpu_custom_call.1} parent=55 // pred_fallthru
        _
    $region56: #{tpu_custom_call.1} parent=5 // pred_fallthru
      _
  $region6: #{tpu_custom_call.1} parent=0 // loop_footer
    %s17 = sadd.s32 1, %s13
  $region7: #{tpu_custom_call.1} parent=0 // loop_footer_branch
    %12 = sbr.rel target = $region3
  $region8: #{tpu_custom_call.1} parent=0 // loop_exit
    _

</llo_original>
